<compile_context>
chip_gen: v5e
topology: v5e:2x2
jax: 0.10.0
libtpu: 0.0.40
codegen_flags: <defaults>
</compile_context>

<pallas_src>
import functools
import math

import jax
import jax.numpy as jnp
from jax import lax
from jax.experimental import pallas as pl
from jax.experimental.pallas import tpu as pltpu


_LANE = 128  # TPU lane (last-dim) granularity


def _round_up(x: int, m: int) -> int:
    return ((x + m - 1) // m) * m


def _sublane(dtype) -> int:
    # f32 packs 8 rows per vreg; 16-bit dtypes pack 16.
    return 8 if jnp.dtype(dtype).itemsize >= 4 else 16


def _vmem_limit(bytes_needed: int) -> int:
    # Explicit scoped-VMEM budget: margin for compiler temporaries, but stay
    # well under v7x's 64 MiB physical VMEM.
    return int(min(max(2 * bytes_needed, 16 * 1024 * 1024), 48 * 1024 * 1024))


# ---------------------------------------------------------------------------
# Projection kernel: y = x @ W.T  (PyTorch Linear, no bias)
# ---------------------------------------------------------------------------
def _linear_kernel(x_ref, w_ref, o_ref):
    # x_ref: (1, ts, Din); w_ref: (Dout, Din); o_ref: (1, ts, Dout)
    # Contract the last dims directly -> no in-kernel weight transpose.
    o_ref[0] = lax.dot_general(
        x_ref[0], w_ref[...],
        dimension_numbers=(((1,), (1,)), ((), ())),
        preferred_element_type=jnp.float32,
    ).astype(o_ref.dtype)


def _linear_no_bias(x, w, *, block_s):
    """x: (B, S, Din), w: (Dout, Din) -> (B, S, Dout). Dims pre-padded/aligned."""
    B, S, Din = x.shape
    Dout = w.shape[0]
    ts = min(block_s, S)
    assert S % ts == 0

    itemsize = jnp.dtype(x.dtype).itemsize
    need = 2 * (ts * Din + Dout * Din + ts * Dout) * itemsize

    return pl.pallas_call(
        _linear_kernel,
        out_shape=jax.ShapeDtypeStruct((B, S, Dout), x.dtype),
        grid_spec=pltpu.PrefetchScalarGridSpec(
            num_scalar_prefetch=0,
            grid=(B, S // ts),
            in_specs=[
                pl.BlockSpec((1, ts, Din), lambda b, s: (b, s, 0)),
                # Weight block is constant across the grid (resident in VMEM).
                pl.BlockSpec((Dout, Din), lambda b, s: (0, 0)),
            ],
            out_specs=pl.BlockSpec((1, ts, Dout), lambda b, s: (b, s, 0)),
        ),
        compiler_params=pltpu.CompilerParams(
            dimension_semantics=("parallel", "parallel"),
            vmem_limit_bytes=_vmem_limit(need),
        ),
    )(x, w)


# ---------------------------------------------------------------------------
# Flash-attention kernel (online softmax over kv tiles)
# ---------------------------------------------------------------------------
def _flash_kernel(q_ref, k_ref, v_ref, o_ref, m_sc, l_sc, acc_sc,
                  *, scale, kv_len, block_k, need_kv_mask):
    ki = pl.program_id(2)

    @pl.when(ki == 0)
    def _init():
        m_sc[...] = jnp.full(m_sc.shape, -jnp.inf, dtype=m_sc.dtype)
        l_sc[...] = jnp.zeros(l_sc.shape, dtype=l_sc.dtype)
        acc_sc[...] = jnp.zeros(acc_sc.shape, dtype=acc_sc.dtype)

    q = q_ref[0]  # (tq, Dk_p)
    k = k_ref[0]  # (tk, Dk_p)

    # q . k^T by contracting the last (head) dims -> no transposed operand.
    s = lax.dot_general(
        q, k, dimension_numbers=(((1,), (1,)), ((), ())),
        preferred_element_type=jnp.float32,
    ) * scale  # (tq, tk); reference scales by 1/sqrt(dim_model)

    if need_kv_mask:
        # Mask padded kv columns introduced by sequence padding.
        col = ki * block_k + lax.broadcasted_iota(jnp.int32, s.shape, 1)
        s = jnp.where(col < kv_len, s, -1e30)

    m_prev = m_sc[...]
    m_new = jnp.maximum(m_prev, jnp.max(s, axis=-1, keepdims=True))
    alpha = jnp.exp(m_prev - m_new)
    p = jnp.exp(s - m_new)

    l_sc[...] = alpha * l_sc[...] + jnp.sum(p, axis=-1, keepdims=True)
    acc_sc[...] = alpha * acc_sc[...] + jnp.dot(
        p.astype(v_ref.dtype), v_ref[0], preferred_element_type=jnp.float32)
    m_sc[...] = m_new

    @pl.when(ki == pl.num_programs(2) - 1)
    def _finalize():
        inv_l = pl.reciprocal(l_sc[...], approx=True)  # EUP slot, effectively free
        o_ref[0] = (acc_sc[...] * inv_l).astype(o_ref.dtype)


# ---------------------------------------------------------------------------
# Wrapper
# ---------------------------------------------------------------------------
def dot_product_attention(query, key, value, wq, wk, wv, mask=None,
                          *, block_q=256, block_k=256):
    """query: (B, Sq, Dm); key/value: (B, Skv, Dm); wq/wk: (Dk, Dm); wv: (Dm, Dm)."""
    if mask is not None:
        # TODO(synk): optional `mask` (masked_fill with -1e9) path not implemented.
        raise NotImplementedError("mask is not supported by this Pallas kernel")

    B, Sq, Dm = query.shape
    _, Skv, _ = key.shape
    Dk = wq.shape[0]
    dtype = query.dtype

    # ---- lane/sublane alignment & padding ------------------------------------
    sub = _sublane(dtype)
    Dm_p = _round_up(Dm, _LANE)
    Dk_p = _round_up(Dk, _LANE)

    tq = min(_round_up(block_q, sub), _round_up(Sq, sub))
    tk = min(_round_up(block_k, sub), _round_up(Skv, sub))
    Sq_p = _round_up(Sq, tq)
    Skv_p = _round_up(Skv, tk)

    qx = jnp.pad(query, ((0, 0), (0, Sq_p - Sq), (0, Dm_p - Dm)))
    kx = jnp.pad(key, ((0, 0), (0, Skv_p - Skv), (0, Dm_p - Dm)))
    vx = jnp.pad(value, ((0, 0), (0, Skv_p - Skv), (0, Dm_p - Dm)))
    wq_p = jnp.pad(wq, ((0, Dk_p - Dk), (0, Dm_p - Dm)))
    wk_p = jnp.pad(wk, ((0, Dk_p - Dk), (0, Dm_p - Dm)))
    wv_p = jnp.pad(wv, ((0, Dm_p - Dm), (0, Dm_p - Dm)))

    # ---- projections hoisted out of the attention tile loop ------------------
    qp = _linear_no_bias(qx, wq_p, block_s=tq)    # (B, Sq_p,  Dk_p)
    kp = _linear_no_bias(kx, wk_p, block_s=tk)    # (B, Skv_p, Dk_p)
    vp = _linear_no_bias(vx, wv_p, block_s=tk)    # (B, Skv_p, Dm_p)

    # ---- flash-style attention: grid (batch, q-tile, kv-tile) ----------------
    scale = 1.0 / math.sqrt(Dm)                   # reference: sqrt(dim_model)
    need_kv_mask = Skv_p != Skv

    kernel = functools.partial(_flash_kernel, scale=scale, kv_len=Skv,
                               block_k=tk, need_kv_mask=need_kv_mask)

    itemsize = jnp.dtype(dtype).itemsize
    need = (2 * (tq * Dk_p + tk * Dk_p + tk * Dm_p + tq * Dm_p) * itemsize
            + (2 * tq + tq * Dm_p) * 4)

    out_p = pl.pallas_call(
        kernel,
        out_shape=jax.ShapeDtypeStruct((B, Sq_p, Dm_p), dtype),
        grid_spec=pltpu.PrefetchScalarGridSpec(
            num_scalar_prefetch=0,
            grid=(B, Sq_p // tq, Skv_p // tk),
            in_specs=[
                pl.BlockSpec((1, tq, Dk_p), lambda b, qi, ki: (b, qi, 0)),
                pl.BlockSpec((1, tk, Dk_p), lambda b, qi, ki: (b, ki, 0)),
                pl.BlockSpec((1, tk, Dm_p), lambda b, qi, ki: (b, ki, 0)),
            ],
            out_specs=pl.BlockSpec((1, tq, Dm_p), lambda b, qi, ki: (b, qi, 0)),
            scratch_shapes=[
                pltpu.VMEM((tq, 1), jnp.float32),      # running max m
                pltpu.VMEM((tq, 1), jnp.float32),      # running denom l
                pltpu.VMEM((tq, Dm_p), jnp.float32),   # output accumulator
            ],
        ),
        compiler_params=pltpu.CompilerParams(
            dimension_semantics=("parallel", "parallel", "arbitrary"),
            vmem_limit_bytes=_vmem_limit(need),
        ),
    )(qp, kp, vp)

    return out_p[:, :Sq, :Dm]


def _reference(query, key, value, wq, wk, wv):
    # Pure-JAX reference mirroring the PyTorch forward (mask=None).
    q = query @ wq.T
    k = key @ wk.T
    v = value @ wv.T
    scores = jnp.einsum("bqd,bkd->bqk", q, k) / jnp.sqrt(jnp.float32(query.shape[-1]))
    attn = jax.nn.softmax(scores, axis=-1)
    return jnp.einsum("bqk,bkd->bqd", attn, v)


if __name__ == "__main__":
    key0 = jax.random.PRNGKey(0)
    k_q, k_k, k_v, k_wq, k_wk, k_wv = jax.random.split(key0, 6)

    # nn.Linear-style init: U(-1/sqrt(in_features), 1/sqrt(in_features)).
    B, S, Dm, Dk = 2, 8, 32, 16
    bound = 1.0 / math.sqrt(Dm)
    wq = jax.random.uniform(k_wq, (Dk, Dm), minval=-bound, maxval=bound, dtype=jnp.float32)
    wk = jax.random.uniform(k_wk, (Dk, Dm), minval=-bound, maxval=bound, dtype=jnp.float32)
    wv = jax.random.uniform(k_wv, (Dm, Dm), minval=-bound, maxval=bound, dtype=jnp.float32)

    # Case 1: tiny aligned-to-tile shapes (single kv tile).
    query = jax.random.normal(k_q, (B, S, Dm), dtype=jnp.float32)
    keyx = jax.random.normal(k_k, (B, S, Dm), dtype=jnp.float32)
    value = jax.random.normal(k_v, (B, S, Dm), dtype=jnp.float32)

    out = jax.block_until_ready(dot_product_attention(query, keyx, value, wq, wk, wv))
    ref = _reference(query, keyx, value, wq, wk, wv)
    assert out.shape == (B, S, Dm)
    # Tolerance covers the approximate EUP reciprocal used for the softmax denom.
    assert jnp.allclose(out, ref, atol=5e-3, rtol=5e-3), float(jnp.max(jnp.abs(out - ref)))

    # Case 2: non-tile-aligned sequence with small tiles — exercises the online
    # softmax across multiple kv tiles and the padded-kv masking path.
    S2 = 20
    query2 = jax.random.normal(k_q, (B, S2, Dm), dtype=jnp.float32)
    keyx2 = jax.random.normal(k_k, (B, S2, Dm), dtype=jnp.float32)
    value2 = jax.random.normal(k_v, (B, S2, Dm), dtype=jnp.float32)

    out2 = jax.block_until_ready(
        dot_product_attention(query2, keyx2, value2, wq, wk, wv, block_q=8, block_k=8))
    ref2 = _reference(query2, keyx2, value2, wq, wk, wv)
    assert out2.shape == (B, S2, Dm)
    assert jnp.allclose(out2, ref2, atol=5e-3, rtol=5e-3), float(jnp.max(jnp.abs(out2 - ref2)))

    print("KERNEL_OK")
</pallas_src>

<mosaic_0001>
module attributes {stable_mosaic.version = 11 : i64} {
  func.func @_linear_kernel(%arg0: i32, %arg1: i32, %arg2: memref<1x8x128xf32, #tpu.memory_space<vmem>>, %arg3: memref<128x128xf32, #tpu.memory_space<vmem>>, %arg4: memref<1x8x128xf32, #tpu.memory_space<vmem>>) attributes {dimension_semantics = [#tpu.dimension_semantics<parallel>, #tpu.dimension_semantics<parallel>], iteration_bounds = array<i64: 2, 1>, scalar_prefetch = 0 : i64, scratch_operands = 0 : i64, tpu.core_type = #tpu.core_type<tc>, window_params = [{transform_indices = @transform_0, window_bounds = array<i64: 1, 8, 128>}, {pipeline_mode = #tpu.pipeline_mode<synchronous>, transform_indices = @transform_1, window_bounds = array<i64: 128, 128>}, {transform_indices = @transform_2, window_bounds = array<i64: 1, 8, 128>}]} {
    %c0 = arith.constant 0 : index
    %c0_0 = arith.constant 0 : index
    %c0_1 = arith.constant 0 : index
    %0 = vector.load %arg2[%c0, %c0_0, %c0_1] : memref<1x8x128xf32, #tpu.memory_space<vmem>>, vector<1x8x128xf32>
    %1 = vector.shape_cast %0 : vector<1x8x128xf32> to vector<8x128xf32>
    %c0_2 = arith.constant 0 : index
    %c0_3 = arith.constant 0 : index
    %2 = vector.load %arg3[%c0_2, %c0_3] : memref<128x128xf32, #tpu.memory_space<vmem>>, vector<128x128xf32>
    %cst = arith.constant dense<0.000000e+00> : vector<8x128xf32>
    %3 = tpu.matmul %1, %2, %cst {dimension_numbers = #tpu.dot_dimension_numbers<[1], [1], [0], [0], [0, 0, 1, 0], [], []>} : vector<8x128xf32>, vector<128x128xf32>, vector<8x128xf32> -> vector<8x128xf32>
    %c0_4 = arith.constant 0 : index
    %c0_5 = arith.constant 0 : index
    %c0_6 = arith.constant 0 : index
    %4 = vector.load %arg4[%c0_4, %c0_5, %c0_6] : memref<1x8x128xf32, #tpu.memory_space<vmem>>, vector<1x8x128xf32>
    %5 = vector.shape_cast %4 : vector<1x8x128xf32> to vector<8x128xf32>
    %6 = vector.shape_cast %3 : vector<8x128xf32> to vector<1x8x128xf32>
    tpu.vector_store %arg4[%c0_4, %c0_5, %c0_6], %6 {strides = array<i32>} : memref<1x8x128xf32, #tpu.memory_space<vmem>>, vector<1x8x128xf32>,
    return
  }
  func.func @transform_0(%arg0: i32, %arg1: i32) -> (i32, i32, i32) {
    %c0_i32 = arith.constant 0 : i32
    %c0_i32_0 = arith.constant 0 : i32
    return %arg0, %arg1, %c0_i32 : i32, i32, i32
  }
  func.func @transform_1(%arg0: i32, %arg1: i32) -> (i32, i32) {
    %c0_i32 = arith.constant 0 : i32
    %c0_i32_0 = arith.constant 0 : i32
    %c0_i32_1 = arith.constant 0 : i32
    return %c0_i32, %c0_i32_0 : i32, i32
  }
  func.func @transform_2(%arg0: i32, %arg1: i32) -> (i32, i32, i32) {
    %c0_i32 = arith.constant 0 : i32
    %c0_i32_0 = arith.constant 0 : i32
    return %arg0, %arg1, %c0_i32 : i32, i32, i32
  }
}

</mosaic_0001>

<llo_original>
// kernel: tpu_custom_call.1
$region0: #{tpu_custom_call.1}
  #allocation0 [shape = 'u32[]', space=smem, size = 0x4, offset = 0x4, fixed_abs, tag = 'smem constant byte address 0x4 - core index']
  #allocation1 [shape = 'u32[72,128]{1,0:T(1,128)}', space=vmem, size = 0x9000, scoped, tag = 'internal scratch']
  %s0 = inlined_call_operand.hbm [shape: f32[2,8,128], index: 0, kind: input, shape index: {}]
  %s1 = inlined_call_operand.hbm [shape: f32[128,128], index: 1, kind: input, shape index: {}]
  %s2 = inlined_call_operand.hbm [shape: f32[2,8,128], index: 2, kind: output, shape index: {}]
  %s3 = sld [smem:[#allocation0]]
  $region49: #{tpu_custom_call.1} parent=0
    _
  %s5 = ssub.s32 1, %s3
  %s6 = scalar_select 0, %s5, %s3
  $region1: #{tpu_custom_call.1} parent=0
    #allocation2 [shape = 'u8[8192]{0}', space=vmem, size = 0x2000, scoped, tag = 'input window, operand 0']
    #allocation3 [shape = 's32[2]{0}', space=sflag, size = 0x8, scoped, tag = 'scoped memory for tpu_custom_call.1']
    #allocation4 [shape = 's32[2]{0}', space=sflag, size = 0x8, scoped, tag = 'scoped memory for tpu_custom_call.1']
    #allocation5 [shape = 'u8[65536]{0}', space=vmem, size = 0x10000, scoped, tag = 'input window, operand 1, single buffered']
    #allocation6 [shape = 's32[1]{0}', space=sflag, size = 0x4, scoped, tag = 'scoped memory for tpu_custom_call.1']
    #allocation7 [shape = 'u8[8192]{0}', space=vmem, size = 0x2000, scoped, tag = 'output window, operand 0']
    %7 = vsyncpa [#allocation3], 0
    %s8 = scalar_lea.sflag [#allocation3], 1
    %9 = vsyncpa %s8, 0
    %10 = vsyncpa [#allocation6], 0
    %11 = vsyncpa [#allocation4], 0
    %s12 = scalar_lea.sflag [#allocation4], 1
    %13 = vsyncpa %s12, 0
    loop: start=0, step=1, limit=4
    $region2: #{tpu_custom_call.1} parent=1 // loop_pre_header
      _
    $region3: #{tpu_custom_call.1} parent=1 // loop_header
      %s15 = sphi 0, %s19
      %p16 = scmp.ge.s32.totalorder %s15, 4
      %s22 = sphi 0, %s34
      %s23 = sphi 0, %s30
      %s24 = sphi 0, %s22
      %s25 = sphi 0, %s23
      %s26 = sphi 0, %s24
      %s27 = sphi 0, %s25
      %s39 = sphi 0, %s41
      %s42 = sphi 0, %s39
      %s43 = sphi 0, %s42
      %s59 = sphi 0, %s43
      %s63 = sphi 0, %s63
      %s65 = sphi 0, %s63
      %s66 = sphi 0, %s65
      %s80 = sphi 0, %s66
      %s88 = sphi 0, %s90
      %s91 = sphi 0, %s88
      %s92 = sphi 0, %s91
      %s108 = sphi 0, %s92
    $region4: #{tpu_custom_call.1} parent=1 // loop_header_branch
      %18 = sbr.rel (%p16) target = $region8
    $region5: #{tpu_custom_call.1} parent=1 // loop_body
      %s20 = ssub.s32 %s15, 1
      %s21 = ssub.s32 %s15, 2
      %s28 = sadd.s32 1, %s23
      %p29 = scmp.ge.s32.totalorder %s28, 1
      %s30 = scalar_select %p29, 0, %s28
      %s31 = sadd.s32 1, %s22
      %s32 = scalar_select %p29, %s31, %s22
      %p33 = scmp.ge.s32.totalorder %s32, 2
      %s34 = scalar_select %p33, 0, %s32
      %s35 = ssub.s32 %s22, %s34
      %s36 = ssub.s32 %s23, %s30
      %s37 = sor.u32 %s35, %s36
      %p38 = scmp.eq.s32.totalorder %s37, 0
      %s40 = sadd.s32 %s39, 1
      %s41 = scalar_select %p38, %s39, %s40
      %p44 = pneg %p38
      %p45 = scmp.eq.s32.totalorder %s15, 1
      %p46 = por %p44, %p45
      %p47 = scmp.ne.s32.totalorder %s39, %s42
      %p48 = scmp.eq.s32.totalorder %s15, 0
      %p49 = por %p47, %p48
      %p50 = scmp.ne.s32.totalorder %s39, %s42
      %p51 = scmp.eq.s32.totalorder %s20, 1
      %p52 = por %p50, %p51
      %p53 = scmp.ne.s32.totalorder %s42, %s43
      %p54 = scmp.eq.s32.totalorder %s20, 0
      %p55 = por %p53, %p54
      %p56 = scmp.ne.s32.totalorder %s42, %s43
      %p57 = scmp.eq.s32.totalorder %s21, 1
      %p58 = por %p56, %p57
      %p60 = scmp.ne.s32.totalorder %s43, %s59
      %p61 = scmp.eq.s32.totalorder %s21, 0
      %p62 = por %p60, %p61
      %s64 = sadd.s32 %s63, 1
      %p67 = scmp.eq.s32.totalorder %s15, 1
      %p68 = scmp.ne.s32.totalorder %s63, %s65
      %p69 = scmp.eq.s32.totalorder %s15, 0
      %p70 = por %p68, %p69
      %p71 = scmp.ne.s32.totalorder %s63, %s65
      %p72 = scmp.eq.s32.totalorder %s20, 1
      %p73 = por %p71, %p72
      %p74 = scmp.ne.s32.totalorder %s65, %s66
      %p75 = scmp.eq.s32.totalorder %s20, 0
      %p76 = por %p74, %p75
      %p77 = scmp.ne.s32.totalorder %s65, %s66
      %p78 = scmp.eq.s32.totalorder %s21, 1
      %p79 = por %p77, %p78
      %p81 = scmp.ne.s32.totalorder %s66, %s80
      %p82 = scmp.eq.s32.totalorder %s21, 0
      %p83 = por %p81, %p82
      %s84 = ssub.s32 %s22, %s34
      %s85 = ssub.s32 %s23, %s30
      %s86 = sor.u32 %s84, %s85
      %p87 = scmp.eq.s32.totalorder %s86, 0
      %s89 = sadd.s32 %s88, 1
      %s90 = scalar_select %p87, %s88, %s89
      %p93 = pneg %p87
      %p94 = scmp.eq.s32.totalorder %s15, 1
      %p95 = por %p93, %p94
      %p96 = scmp.ne.s32.totalorder %s88, %s91
      %p97 = scmp.eq.s32.totalorder %s15, 0
      %p98 = por %p96, %p97
      %p99 = scmp.ne.s32.totalorder %s88, %s91
      %p100 = scmp.eq.s32.totalorder %s20, 1
      %p101 = por %p99, %p100
      %p102 = scmp.ne.s32.totalorder %s91, %s92
      %p103 = scmp.eq.s32.totalorder %s20, 0
      %p104 = por %p102, %p103
      %p105 = scmp.ne.s32.totalorder %s91, %s92
      %p106 = scmp.eq.s32.totalorder %s21, 1
      %p107 = por %p105, %p106
      %p109 = scmp.ne.s32.totalorder %s92, %s108
      %p110 = scmp.eq.s32.totalorder %s21, 0
      %p111 = por %p109, %p110
      %p112 = scmp.le.s32.totalorder 1, %s15
      %p113 = scmp.lt.s32.totalorder %s15, 3
      %p114 = pnand %p112, %p113
      %p115 = pneg %p114
      // Predicated region
      $region9: #{tpu_custom_call.1} parent=5 // pred_check
        _
      $region10: #{tpu_custom_call.1} parent=5 // pred_check_branch
        %117 = sbr.rel (%p114) target = $region12
      $region11: #{tpu_custom_call.1} parent=5 // pred_region
        %s118 = ssub.s32 %s15, 1
        // Predicated region
        $region13: #{tpu_custom_call.1} parent=11 // pred_check
          %p119 = pneg %p76
        $region14: #{tpu_custom_call.1} parent=11 // pred_check_branch
          %121 = sbr.rel (%p119) target = $region16
        $region15: #{tpu_custom_call.1} parent=11 // pred_region
          %123 = vsyncadd [#allocation6], 0
          %s124 = sshll.u32 %s1, 4
          %s125 = int_to_ptr.hbm [resolvable:$true] %s124
          %s126 = sshll.u32 [#allocation5], 4
          %s127 = int_to_ptr.vmem [resolvable:$true] %s126
          %132 = dma.hbm_to_vmem [thread:$0]  %s125, 2048, %s127, [#allocation6], 128, 128, 8
        $region16: #{tpu_custom_call.1} parent=11 // pred_fallthru
          _
      $region12: #{tpu_custom_call.1} parent=5 // pred_fallthru
        _
      %p133 = scmp.lt.s32.totalorder %s15, 2
      // Predicated region
      $region17: #{tpu_custom_call.1} parent=5 // pred_check
        %p134 = pneg %p133
      $region18: #{tpu_custom_call.1} parent=5 // pred_check_branch
        %136 = sbr.rel (%p134) target = $region20
      $region19: #{tpu_custom_call.1} parent=5 // pred_region
        // Predicated region
        $region21: #{tpu_custom_call.1} parent=19 // pred_check
          %p137 = pneg %p49
        $region22: #{tpu_custom_call.1} parent=19 // pred_check_branch
          %139 = sbr.rel (%p137) target = $region24
        $region23: #{tpu_custom_call.1} parent=19 // pred_region
          %s140 = sand.u32 %s39, 1
          %s141 = scalar_lea.sflag [#allocation3], %s140
          %s142 = sand.u32 %s39, 1
          %s143 = smul.addr %s142, 8
          %s144 = scalar_lea.vmem [#allocation2], %s143
          %146 = vsyncadd %s141, 0
          %s147 = sadd.s32 %s23, %s22
          %s148 = smul.addr %s147, 8
          %s149 = scalar_lea.hbm %s0, %s148
          %s151 = sshll.u32 %s149, 4
          %s152 = int_to_ptr.hbm [resolvable:$true] %s151
          %s153 = sshll.u32 %s144, 4
          %s154 = int_to_ptr.vmem [resolvable:$true] %s153
          %156 = dma.hbm_to_vmem [thread:$0]  %s152, 128, %s154, %s141
        $region24: #{tpu_custom_call.1} parent=19 // pred_fallthru
          _
      $region20: #{tpu_custom_call.1} parent=5 // pred_fallthru
        _
      %p157 = scmp.le.s32.totalorder 1, %s15
      %p158 = scmp.lt.s32.totalorder %s15, 3
      %p159 = pnand %p157, %p158
      %p160 = pneg %p159
      // Predicated region
      $region25: #{tpu_custom_call.1} parent=5 // pred_check
        _
      $region26: #{tpu_custom_call.1} parent=5 // pred_check_branch
        %162 = sbr.rel (%p159) target = $region28
      $region27: #{tpu_custom_call.1} parent=5 // pred_region
        %s163 = ssub.s32 %s15, 1
        %s164 = sand.u32 %s42, 1
        %s165 = scalar_lea.sflag [#allocation3], %s164
        %s166 = sand.u32 %s42, 1
        %s167 = smul.addr %s166, 8
        %s168 = scalar_lea.vmem [#allocation2], %s167
        // Predicated region
        $region29: #{tpu_custom_call.1} parent=27 // pred_check
          %p169 = pneg %p55
        $region30: #{tpu_custom_call.1} parent=27 // pred_check_branch
          %171 = sbr.rel (%p169) target = $region32
        $region31: #{tpu_custom_call.1} parent=27 // pred_region
          %173 = dma.done %s165, 128
        $region32: #{tpu_custom_call.1} parent=27 // pred_fallthru
          _
        // Predicated region
        $region33: #{tpu_custom_call.1} parent=27 // pred_check
          %p174 = pneg %p76
        $region34: #{tpu_custom_call.1} parent=27 // pred_check_branch
          %176 = sbr.rel (%p174) target = $region36
        $region35: #{tpu_custom_call.1} parent=27 // pred_region
          %178 = dma.done [#allocation6], 2048
        $region36: #{tpu_custom_call.1} parent=27 // pred_fallthru
          _
        %s179 = sand.u32 %s42, 1
        %s180 = scalar_lea.sflag [#allocation3], %s179
        %s181 = sand.u32 %s42, 1
        %s182 = smul.addr %s181, 8
        %s183 = scalar_lea.vmem [#allocation2], %s182
        %p184 = pneg %p55
        %p185 = pneg %p52
        %p186 = pneg %p76
        %p187 = pneg %p73
        %p188 = pneg %p104
        %p189 = pneg %p101
        %s190 = sand.u32 %s91, 1
        %s191 = scalar_lea.sflag [#allocation4], %s190
        %s192 = sand.u32 %s91, 1
        %s193 = smul.addr %s192, 8
        %s194 = scalar_lea.vmem [#allocation7], %s193
        %v195 = vld [vmem:[%s168] sm:$0xff]
        %v196 = vld [vmem:[#allocation5] sm:$0xff]
        %v197 = vld [vmem:[#allocation5 + $0x8] sm:$0xff]
        %v198 = vld [vmem:[#allocation5 + $0x10] sm:$0xff]
        %v199 = vld [vmem:[#allocation5 + $0x18] sm:$0xff]
        %v200 = vld [vmem:[#allocation5 + $0x20] sm:$0xff]
        %v201 = vld [vmem:[#allocation5 + $0x28] sm:$0xff]
        %v202 = vld [vmem:[#allocation5 + $0x30] sm:$0xff]
        %v203 = vld [vmem:[#allocation5 + $0x38] sm:$0xff]
        %v204 = vld [vmem:[#allocation5 + $0x40] sm:$0xff]
        %v205 = vld [vmem:[#allocation5 + $0x48] sm:$0xff]
        %v206 = vld [vmem:[#allocation5 + $0x50] sm:$0xff]
        %v207 = vld [vmem:[#allocation5 + $0x58] sm:$0xff]
        %v208 = vld [vmem:[#allocation5 + $0x60] sm:$0xff]
        %v209 = vld [vmem:[#allocation5 + $0x68] sm:$0xff]
        %v210 = vld [vmem:[#allocation5 + $0x70] sm:$0xff]
        %v211 = vld [vmem:[#allocation5 + $0x78] sm:$0xff]
        %212 = vmatpush.xpose.msra.mxu0 %v211
        %213 = vmatpush.xpose.msra.mxu0 %v210
        %214 = vmatpush.xpose.msra.mxu0 %v209
        %215 = vmatpush.xpose.msra.mxu0 %v208
        %216 = vmatpush.xpose.msra.mxu0 %v207
        %217 = vmatpush.xpose.msra.mxu0 %v206
        %218 = vmatpush.xpose.msra.mxu0 %v205
        %219 = vmatpush.xpose.msra.mxu0 %v204
        %220 = vmatpush.xpose.msra.mxu0 %v203
        %221 = vmatpush.xpose.msra.mxu0 %v202
        %222 = vmatpush.xpose.msra.mxu0 %v201
        %223 = vmatpush.xpose.msra.mxu0 %v200
        %224 = vmatpush.xpose.msra.mxu0 %v199
        %225 = vmatpush.xpose.msra.mxu0 %v198
        %226 = vmatpush.xpose.msra.mxu0 %v197
        %227 = vmatpush.xpose.msra.mxu0 %v196
        %228 = vmatmul.f32.gmra.mxu0 %v195
        %v229 = vpop.f32.mrf.mxu0
        %v230 = vadd.f32 0.0, %v229
        %231 = vdwg.mxu0
        %232 = vst [vmem:[%s194] sm:$0xff] %v230
        %s233 = sand.u32 %s91, 1
        %s234 = scalar_lea.sflag [#allocation4], %s233
        %s235 = sand.u32 %s91, 1
        %s236 = smul.addr %s235, 8
        %s237 = scalar_lea.vmem [#allocation7], %s236
        // Predicated region
        $region37: #{tpu_custom_call.1} parent=27 // pred_check
          %p238 = pneg %p101
        $region38: #{tpu_custom_call.1} parent=27 // pred_check_branch
          %240 = sbr.rel (%p238) target = $region40
        $region39: #{tpu_custom_call.1} parent=27 // pred_region
          %242 = vsyncadd %s234, 0
          %s243 = sadd.s32 %s25, %s24
          %s244 = smul.addr %s243, 8
          %s245 = scalar_lea.hbm %s2, %s244
          %s247 = sshll.u32 %s237, 4
          %s248 = int_to_ptr.vmem [resolvable:$true] %s247
          %s249 = sshll.u32 %s245, 4
          %s250 = int_to_ptr.hbm [resolvable:$true] %s249
          %252 = dma.vmem_to_hbm [thread:$0]  %s248, 128, %s250, %s234
        $region40: #{tpu_custom_call.1} parent=27 // pred_fallthru
          _
      $region28: #{tpu_custom_call.1} parent=5 // pred_fallthru
        _
      %p253 = scmp.le.s32.totalorder 2, %s15
      // Predicated region
      $region41: #{tpu_custom_call.1} parent=5 // pred_check
        %p254 = pneg %p253
      $region42: #{tpu_custom_call.1} parent=5 // pred_check_branch
        %256 = sbr.rel (%p254) target = $region44
      $region43: #{tpu_custom_call.1} parent=5 // pred_region
        %s257 = ssub.s32 %s15, 2
        // Predicated region
        $region45: #{tpu_custom_call.1} parent=43 // pred_check
          %p258 = pneg %p107
        $region46: #{tpu_custom_call.1} parent=43 // pred_check_branch
          %260 = sbr.rel (%p258) target = $region48
        $region47: #{tpu_custom_call.1} parent=43 // pred_region
          %s261 = sand.u32 %s92, 1
          %s262 = scalar_lea.sflag [#allocation4], %s261
          %s263 = sand.u32 %s92, 1
          %s264 = smul.addr %s263, 8
          %s265 = scalar_lea.vmem [#allocation7], %s264
          %267 = dma.done %s262, 128
        $region48: #{tpu_custom_call.1} parent=43 // pred_fallthru
          _
      $region44: #{tpu_custom_call.1} parent=5 // pred_fallthru
        _
    $region6: #{tpu_custom_call.1} parent=1 // loop_footer
      %s19 = sadd.s32 1, %s15
    $region7: #{tpu_custom_call.1} parent=1 // loop_footer_branch
      %14 = sbr.rel target = $region3
    $region8: #{tpu_custom_call.1} parent=1 // loop_exit
      _
    %268 = vsyncpa [#allocation3], 1
    %s269 = scalar_lea.sflag [#allocation3], 1
    %270 = vsyncpa %s269, 1
    %271 = vsyncpa [#allocation6], 1
    %272 = vsyncpa [#allocation4], 1
    %s273 = scalar_lea.sflag [#allocation4], 1
    %274 = vsyncpa %s273, 1

</llo_original>
